<compile_context>
chip_gen: v7x
topology: tpu7x:2x2x1
jax: 0.10.0
libtpu: 0.0.40
codegen_flags: <defaults>
</compile_context>

<pallas_src>
import jax
import jax.numpy as jnp
from jax.experimental import pallas as pl
from jax.experimental.pallas import tpu as pltpu

_LANE = 128


def _round_up(v, m):
    return ((v + m - 1) // m) * m


# ---------------------------------------------------------------------------
# Kernels
# ---------------------------------------------------------------------------
def _linear_kernel_direct(x_ref, w_ref, b_ref, o_ref):
    """y = x @ w + b, accumulating directly into the resident output block.

    x_ref: (tm, tk)  activations (cast to weight dtype for an MXU-native matmul)
    w_ref: (tk, tn)  weight, pre-transposed to (H, Cp) at prep time (bf16)
    b_ref: (1, tn)   bias (f32)
    o_ref: (tm, tn)  output, resident across the K grid axis
    """
    k = pl.program_id(2)

    @pl.when(k == 0)
    def _():
        # Initialize with the broadcast bias instead of zeros: saves the add in
        # a separate finalize branch.
        o_ref[...] = jnp.broadcast_to(b_ref[...], o_ref.shape).astype(o_ref.dtype)

    acc = jnp.dot(
        x_ref[...].astype(w_ref.dtype),
        w_ref[...],
        preferred_element_type=jnp.float32,
    )
    o_ref[...] += acc.astype(o_ref.dtype)


def _linear_kernel_scratch(x_ref, w_ref, b_ref, o_ref, acc_ref):
    """Same contraction, but with an f32 scratch accumulator.

    Only used for sub-f32 outputs when the K grid has more than one step.
    """
    k = pl.program_id(2)

    @pl.when(k == 0)
    def _():
        acc_ref[...] = jnp.broadcast_to(
            b_ref[...].astype(jnp.float32), acc_ref.shape
        )

    acc_ref[...] += jnp.dot(
        x_ref[...].astype(w_ref.dtype),
        w_ref[...],
        preferred_element_type=jnp.float32,
    )

    @pl.when(k == pl.num_programs(2) - 1)
    def _():
        o_ref[...] = acc_ref[...].astype(o_ref.dtype)


# ---------------------------------------------------------------------------
# One-time parameter prep
# ---------------------------------------------------------------------------
def pad_classifier_params(weight, bias, *, lane=_LANE, param_dtype=jnp.bfloat16):
    """Prepare nn.Linear parameters ONCE for the kernel.

    weight: (C, H) PyTorch layout  ->  returns (H, Cp) in `param_dtype`
    bias:   (C,)                   ->  returns (1, Cp) in f32

    Cp = round_up(C, 128) so the output is lane-dense (unmasked vst). Padded
    rows/bias are zero, so the padded output columns are exactly zero and are
    sliced off (or ignored) by the wrapper. The transpose to (H, Cp) happens
    here, one time, so the kernel uses the canonical (tk, tn) MXU RHS with no
    per-tile XLU transpose. bf16 weights halve HBM traffic on this
    bandwidth-bound head while the MXU still accumulates in f32.
    """
    c, _ = weight.shape
    c_pad = _round_up(c, lane)
    w_p = jnp.pad(weight, ((0, c_pad - c), (0, 0))).T.astype(param_dtype)  # (H, Cp)
    b_p = jnp.pad(bias, (0, c_pad - c)).astype(jnp.float32).reshape(1, c_pad)
    return w_p, b_p


# ---------------------------------------------------------------------------
# Tile selection
# ---------------------------------------------------------------------------
def _pick_tiles(B, Cp, H, tm, tn, tk):
    # M: either the whole (possibly small / ragged) batch, or a multiple-of-8
    # tile with a ragged trailing block (padded reads only feed masked-out rows).
    if B <= tm:
        tm = B
    else:
        tm = max(8, (tm // 8) * 8)

    # N: Cp is a multiple of 128 by construction; keep tn a multiple of 128 and
    # guarantee >= 2 N-blocks when there is enough output so both v7x
    # TensorCores each stream half the weight.
    tn = min(max(_LANE, (tn // _LANE) * _LANE), Cp)
    if Cp // tn < 2 and Cp >= 2 * _LANE:
        tn = max(_LANE, ((Cp // 2) // _LANE) * _LANE)

    # K: a partial reduction block would corrupt valid outputs, so tk must
    # divide H exactly and be lane-aligned; otherwise collapse to a single step
    # (typical classifier-head H fits easily in VMEM).
    if tk is None or tk >= H or (H % tk) != 0 or (tk % _LANE) != 0:
        tk = H
    return tm, tn, tk


# ---------------------------------------------------------------------------
# Wrapper
# ---------------------------------------------------------------------------
def simple_classifier(x, w_padded, b_padded, num_classes, *,
                      tm=256, tn=256, tk=None,
                      keep_padded=False, force_pallas=False):
    """y = x @ weight.T + bias (nn.Linear forward).

    x:        (B, H) activations (cls_embeddings)
    w_padded: (H, Cp) weight, pre-transposed / padded / bf16 (pad_classifier_params)
    b_padded: (1, Cp) bias, f32
    returns   (B, num_classes), or (B, Cp) if keep_padded=True
    """
    B, H = x.shape
    Cp = w_padded.shape[1]
    out_dtype = x.dtype

    # Tiny heads: launch + DMA overhead dwarfs the compute -- let XLA do it
    # (or fuse this into the kernel producing cls_embeddings).
    if not force_pallas and (B * Cp * H) < (1 << 18):
        out = (x.astype(jnp.float32) @ w_padded.astype(jnp.float32)
               + b_padded).astype(out_dtype)
        return out if keep_padded else out[:, :num_classes]

    tm, tn, tk = _pick_tiles(B, Cp, H, tm, tn, tk)
    k_steps = H // tk
    grid = (pl.cdiv(B, tm), pl.cdiv(Cp, tn), k_steps)

    use_scratch = (k_steps > 1) and (jnp.dtype(out_dtype) != jnp.dtype(jnp.float32))
    kernel = _linear_kernel_scratch if use_scratch else _linear_kernel_direct
    scratch = [pltpu.VMEM((tm, tn), jnp.float32)] if use_scratch else []

    # Explicit scoped-VMEM limit only when the (double-buffered) tile footprint
    # outgrows the conservative defaults.
    tile_bytes = (tm * tk * jnp.dtype(x.dtype).itemsize
                  + tk * tn * jnp.dtype(w_padded.dtype).itemsize
                  + tn * jnp.dtype(b_padded.dtype).itemsize
                  + tm * tn * jnp.dtype(out_dtype).itemsize)
    need = 2 * tile_bytes + (2 << 20)
    vmem_limit = None if need <= (16 << 20) else int(min(2 * need, 64 << 20))

    out = pl.pallas_call(
        kernel,
        out_shape=jax.ShapeDtypeStruct((B, Cp), out_dtype),
        grid_spec=pltpu.PrefetchScalarGridSpec(
            num_scalar_prefetch=0,
            grid=grid,
            in_specs=[
                pl.BlockSpec((tm, tk), lambda i, j, k: (i, k)),   # x      (B, H)
                pl.BlockSpec((tk, tn), lambda i, j, k: (k, j)),   # weight (H, Cp)
                pl.BlockSpec((1, tn), lambda i, j, k: (0, j)),    # bias   (1, Cp)
            ],
            out_specs=pl.BlockSpec((tm, tn), lambda i, j, k: (i, j)),
            scratch_shapes=scratch,
        ),
        compiler_params=pltpu.CompilerParams(
            dimension_semantics=("parallel", "parallel", "arbitrary"),
            vmem_limit_bytes=vmem_limit,
        ),
    )(x, w_padded, b_padded)

    return out if keep_padded else out[:, :num_classes]


# ---------------------------------------------------------------------------
# Demo / correctness check
# ---------------------------------------------------------------------------
if __name__ == "__main__":
    batch = 2
    input_size = 32      # hidden size of cls_embeddings
    num_classes = 10

    key = jax.random.PRNGKey(0)
    kx, kw, kb = jax.random.split(key, 3)

    x = jax.random.normal(kx, (batch, input_size), dtype=jnp.float32)

    # Deterministic init mimicking nn.Linear's uniform(-1/sqrt(in), 1/sqrt(in)).
    bound = 1.0 / jnp.sqrt(jnp.float32(input_size))
    weight = jax.random.uniform(
        kw, (num_classes, input_size), minval=-bound, maxval=bound, dtype=jnp.float32
    )
    bias = jax.random.uniform(
        kb, (num_classes,), minval=-bound, maxval=bound, dtype=jnp.float32
    )

    # One-time parameter prep: transpose to (H, Cp), pad C to 128, cast to bf16.
    w_p, b_p = pad_classifier_params(weight, bias)

    # force_pallas=True so the demo exercises the kernel (auto-dispatch would
    # route these tiny shapes to plain XLA).
    out = simple_classifier(x, w_p, b_p, num_classes, force_pallas=True)
    out = jax.block_until_ready(out)

    # Reference with the same bf16 quantization of x and weight, f32 accumulate.
    x_q = x.astype(jnp.bfloat16).astype(jnp.float32)
    w_q = w_p.astype(jnp.float32)                 # (H, Cp), bf16-quantized values
    ref = (x_q @ w_q + b_p)[:, :num_classes]

    assert out.shape == (batch, num_classes)
    assert jnp.allclose(out, ref, atol=1e-4, rtol=1e-4), (
        float(jnp.max(jnp.abs(out - ref)))
    )

    print("KERNEL_OK")
</pallas_src>

<mosaic_0001>
module attributes {stable_mosaic.version = 11 : i64} {
  func.func @_linear_kernel_direct(%arg0: i32, %arg1: i32, %arg2: i32, %arg3: memref<2x32xf32, #tpu.memory_space<vmem>>, %arg4: memref<32x128xbf16, #tpu.memory_space<vmem>>, %arg5: memref<1x128xf32, #tpu.memory_space<vmem>>, %arg6: memref<2x128xf32, #tpu.memory_space<vmem>>) attributes {dimension_semantics = [#tpu.dimension_semantics<parallel>, #tpu.dimension_semantics<parallel>, #tpu.dimension_semantics<arbitrary>], iteration_bounds = array<i64: 1, 1, 1>, scalar_prefetch = 0 : i64, scratch_operands = 0 : i64, tpu.core_type = #tpu.core_type<tc>, window_params = [{transform_indices = @transform_0, window_bounds = array<i64: 2, 32>}, {transform_indices = @transform_1, window_bounds = array<i64: 32, 128>}, {transform_indices = @transform_2, window_bounds = array<i64: 1, 128>}, {transform_indices = @transform_3, window_bounds = array<i64: 2, 128>}]} {
    %c0_i32 = arith.constant 0 : i32
    %0 = arith.cmpi eq, %arg2, %c0_i32 : i32
    %1 = arith.extui %0 : i1 to i32
    %c0_i32_0 = arith.constant 0 : i32
    %2 = arith.cmpi ne, %1, %c0_i32_0 : i32
    scf.if %2 {
      %c0_8 = arith.constant 0 : index
      %c0_9 = arith.constant 0 : index
      %10 = vector.load %arg5[%c0_8, %c0_9] : memref<1x128xf32, #tpu.memory_space<vmem>>, vector<1x128xf32>
      %11 = vector.shape_cast %10 : vector<1x128xf32> to vector<1x128xf32>
      %12 = vector.broadcast %11 : vector<1x128xf32> to vector<2x128xf32>
      %c0_10 = arith.constant 0 : index
      %c0_11 = arith.constant 0 : index
      %13 = vector.load %arg6[%c0_10, %c0_11] : memref<2x128xf32, #tpu.memory_space<vmem>>, vector<2x128xf32>
      tpu.vector_store %arg6[%c0_10, %c0_11], %12 {strides = array<i32>} : memref<2x128xf32, #tpu.memory_space<vmem>>, vector<2x128xf32>,
    } else {
    }
    %c0 = arith.constant 0 : index
    %c0_1 = arith.constant 0 : index
    %3 = vector.load %arg3[%c0, %c0_1] : memref<2x32xf32, #tpu.memory_space<vmem>>, vector<2x32xf32>
    %4 = arith.truncf %3 : vector<2x32xf32> to vector<2x32xbf16>
    %c0_2 = arith.constant 0 : index
    %c0_3 = arith.constant 0 : index
    %5 = vector.load %arg4[%c0_2, %c0_3] : memref<32x128xbf16, #tpu.memory_space<vmem>>, vector<32x128xbf16>
    %cst = arith.constant dense<0.000000e+00> : vector<2x128xf32>
    %6 = tpu.matmul %4, %5, %cst {dimension_numbers = #tpu.dot_dimension_numbers<[1], [0], [0], [1], [0, 0, 1, 1], [], []>} : vector<2x32xbf16>, vector<32x128xbf16>, vector<2x128xf32> -> vector<2x128xf32>
    %c0_4 = arith.constant 0 : index
    %c0_5 = arith.constant 0 : index
    %7 = vector.load %arg6[%c0_4, %c0_5] : memref<2x128xf32, #tpu.memory_space<vmem>>, vector<2x128xf32>
    %8 = arith.addf %7, %6 : vector<2x128xf32>
    %c0_6 = arith.constant 0 : index
    %c0_7 = arith.constant 0 : index
    %9 = vector.load %arg6[%c0_6, %c0_7] : memref<2x128xf32, #tpu.memory_space<vmem>>, vector<2x128xf32>
    tpu.vector_store %arg6[%c0_6, %c0_7], %8 {strides = array<i32>} : memref<2x128xf32, #tpu.memory_space<vmem>>, vector<2x128xf32>,
    return
  }
  func.func @transform_0(%arg0: i32, %arg1: i32, %arg2: i32) -> (i32, i32) {
    %c0_i32 = arith.constant 0 : i32
    return %arg0, %arg2 : i32, i32
  }
  func.func @transform_1(%arg0: i32, %arg1: i32, %arg2: i32) -> (i32, i32) {
    %c0_i32 = arith.constant 0 : i32
    return %arg2, %arg1 : i32, i32
  }
  func.func @transform_2(%arg0: i32, %arg1: i32, %arg2: i32) -> (i32, i32) {
    %c0_i32 = arith.constant 0 : i32
    %c0_i32_0 = arith.constant 0 : i32
    return %c0_i32, %arg1 : i32, i32
  }
  func.func @transform_3(%arg0: i32, %arg1: i32, %arg2: i32) -> (i32, i32) {
    %c0_i32 = arith.constant 0 : i32
    return %arg0, %arg1 : i32, i32
  }
}

</mosaic_0001>

<llo_original>
// kernel: tpu_custom_call.1
$region0: #{tpu_custom_call.1}
  #allocation0 [shape = 'u32[]', space=smem, size = 0x4, offset = 0x4, fixed_abs, tag = 'smem constant byte address 0x4 - core index']
  #allocation1 [shape = 'u32[144,128]{1,0:T(1,128)}', space=vmem, size = 0x12000, scoped, tag = 'internal scratch']
  %s0 = inlined_call_operand.hbm [shape: f32[2,32], index: 0, kind: input, shape index: {}]
  %s1 = inlined_call_operand.hbm [shape: bf16[32,128], index: 1, kind: input, shape index: {}]
  %s2 = inlined_call_operand.vmem [shape: f32[1,128], index: 2, kind: input, shape index: {}]
  %s3 = inlined_call_operand.hbm [shape: f32[2,128], index: 3, kind: output, shape index: {}]
  %s4 = sld [smem:[#allocation0]]
  $region34: #{tpu_custom_call.1} parent=0
    _
  %s6 = ssub.s32 1, %s4
  %s7 = scalar_select 0, %s6, %s4
  $region1: #{tpu_custom_call.1} parent=0
    #allocation2 [shape = 'u8[1024]{0}', space=vmem, size = 0x400, scoped, tag = 'input window, operand 0, single buffered']
    #allocation3 [shape = 's32[1]{0}', space=sflag, size = 0x4, scoped, tag = 'scoped memory for tpu_custom_call.1']
    #allocation4 [shape = 's32[1]{0}', space=sflag, size = 0x4, scoped, tag = 'scoped memory for tpu_custom_call.1']
    #allocation5 [shape = 'u8[8192]{0}', space=vmem, size = 0x2000, scoped, tag = 'input window, operand 1, single buffered']
    #allocation6 [shape = 's32[1]{0}', space=sflag, size = 0x4, scoped, tag = 'scoped memory for tpu_custom_call.1']
    #allocation7 [shape = 'u8[1024]{0}', space=vmem, size = 0x400, scoped, tag = 'output window, operand 0, single buffered']
    %8 = vsyncpa [#allocation3], 0
    %9 = vsyncpa [#allocation6], 0
    %10 = vsyncpa [#allocation4], 0
    // Predicated region
    $region2: #{tpu_custom_call.1} parent=1 // pred_check
      _
    $region3: #{tpu_custom_call.1} parent=1 // pred_check_branch
      %12 = sbr.rel (0) target = $region5
    $region4: #{tpu_custom_call.1} parent=1 // pred_region
      %s14 = ssub.s32 32, 32
      %15 = vsyncadd [#allocation3], %s14
      %s17 = sshll.u32 [#allocation2], 4
      %s18 = int_to_ptr.vmem [resolvable:$true] %s17
      %20 = dma.hbm_to_vmem [thread:$0]  %s0, 32, %s18, [#allocation3]
    $region5: #{tpu_custom_call.1} parent=1 // pred_fallthru
      _
    // Predicated region
    $region6: #{tpu_custom_call.1} parent=1 // pred_check
      _
    $region7: #{tpu_custom_call.1} parent=1 // pred_check_branch
      %22 = sbr.rel (0) target = $region9
    $region8: #{tpu_custom_call.1} parent=1 // pred_region
      %s24 = ssub.s32 256, 256
      %25 = vsyncadd [#allocation6], %s24
      %s26 = sshll.u32 [#allocation5], 4
      %s27 = int_to_ptr.vmem [resolvable:$true] %s26
      %32 = dma.hbm_to_vmem [thread:$0]  %s1, 256, %s27, [#allocation6], 64, 64, 4
    $region9: #{tpu_custom_call.1} parent=1 // pred_fallthru
      _
    // Predicated region
    $region10: #{tpu_custom_call.1} parent=1 // pred_check
      _
    $region11: #{tpu_custom_call.1} parent=1 // pred_check_branch
      %34 = sbr.rel (0) target = $region13
    $region12: #{tpu_custom_call.1} parent=1 // pred_region
      _
    $region13: #{tpu_custom_call.1} parent=1 // pred_fallthru
      _
    // Predicated region
    $region14: #{tpu_custom_call.1} parent=1 // pred_check
      _
    $region15: #{tpu_custom_call.1} parent=1 // pred_check_branch
      %36 = sbr.rel (0) target = $region17
    $region16: #{tpu_custom_call.1} parent=1 // pred_region
      %37 = dma.done [#allocation3], 32
    $region17: #{tpu_custom_call.1} parent=1 // pred_fallthru
      _
    // Predicated region
    $region18: #{tpu_custom_call.1} parent=1 // pred_check
      _
    $region19: #{tpu_custom_call.1} parent=1 // pred_check_branch
      %39 = sbr.rel (0) target = $region21
    $region20: #{tpu_custom_call.1} parent=1 // pred_region
      %40 = dma.done [#allocation6], 256
    $region21: #{tpu_custom_call.1} parent=1 // pred_fallthru
      _
    %p42 = scmp.eq.s32.totalorder 0, 0
    // Predicated region
    $region22: #{tpu_custom_call.1} parent=1 // pred_check
      %p43 = pneg %p42
    $region23: #{tpu_custom_call.1} parent=1 // pred_check_branch
      %45 = sbr.rel (%p43) target = $region25
    $region24: #{tpu_custom_call.1} parent=1 // pred_region
      %v46 = vld [vmem:[%s2] sm:$0x1]
      %v48 = vlaneseq
      %v49 = vshrl.u32 %v48, 7
      %v50 = vsub.s32 0, %v49
      %v51 = vrot.slane %v46, %v50
      %53 = vst [vmem:[#allocation7] sm:$0x3] %v51
    $region25: #{tpu_custom_call.1} parent=1 // pred_fallthru
      _
    %v54 = vld [vmem:[#allocation2] sm:$0x3]
    %v55 = vpack.c.bf16 %v54, %v54
    %v56 = vld [vmem:[#allocation5] sm:$0xf]
    %v57 = vld [vmem:[#allocation5 + $0x4] sm:$0xf]
    %v58 = vld [vmem:[#allocation5 + $0x8] sm:$0xf]
    %v59 = vld [vmem:[#allocation5 + $0xc] sm:$0xf]
    %v64 = vunpack.c.l.b16 %v56
    %v65 = vunpack.c.l.b16 %v57
    %v66 = vunpack.c.l.b16 %v58
    %v67 = vunpack.c.l.b16 %v59
    %v68 = vpack.c.b16 %v65, %v64
    %v69 = vpack.c.b16 %v67, %v66
    %vm72 = vcmask 261120
    %v74 = vsel %vm72, %v55, 0
    %76 = vmatprep.subr.bf16.mxu0 0
    %77 = vmatpush1.bf16.msra.mxu0 %v68
    %78 = vmatprep.subr.bf16.mxu0 0
    %79 = vmatpush1.bf16.msra.mxu0 %v69
    %80 = vmatprep.subr.bf16.mxu0 0
    %81 = vmatpush1.bf16.msra.mxu0 0
    %82 = vmatprep.subr.bf16.mxu0 0
    %83 = vmatpush1.bf16.msra.mxu0 0
    %84 = vmatprep.subr.bf16.mxu0 0
    %85 = vmatpush1.bf16.msra.mxu0 0
    %86 = vmatprep.subr.bf16.mxu0 0
    %87 = vmatpush1.bf16.msra.mxu0 0
    %88 = vmatprep.subr.bf16.mxu0 0
    %89 = vmatpush1.bf16.msra.mxu0 0
    %90 = vmatprep.subr.bf16.mxu0 0
    %91 = vmatpush1.bf16.msra.mxu0 0
    %92 = vmatprep.subr.bf16.mxu0 0
    %93 = vmatpush1.bf16.msra.mxu0 0
    %94 = vmatprep.subr.bf16.mxu0 0
    %95 = vmatpush1.bf16.msra.mxu0 0
    %96 = vmatprep.subr.bf16.mxu0 0
    %97 = vmatpush1.bf16.msra.mxu0 0
    %98 = vmatprep.subr.bf16.mxu0 0
    %99 = vmatpush1.bf16.msra.mxu0 0
    %100 = vmatprep.subr.bf16.mxu0 0
    %101 = vmatpush1.bf16.msra.mxu0 0
    %102 = vmatprep.subr.bf16.mxu0 0
    %103 = vmatpush1.bf16.msra.mxu0 0
    %104 = vmatprep.subr.bf16.mxu0 0
    %105 = vmatpush1.bf16.msra.mxu0 0
    %106 = vmatprep.subr.bf16.mxu0 0
    %107 = vmatpush1.bf16.msra.mxu0 0
    %108 = vmatprep.mubr.bf16.mxu0 0
    %109 = vmatmul.mubr.bf16.gmra.mrb[0].mxu0 %v74
    %v110 = vpop.f32.mrb[0].mxu0
    %v111 = vadd.f32 0.0, %v110
    %v112 = vpop.f32.mrb[0].mxu0
    %v113 = vpop.f32.mrb[0].mxu0
    %v114 = vpop.f32.mrb[0].mxu0
    %115 = vdwg.mxu0
    %v116 = vld [vmem:[#allocation7] sm:$0x3]
    %v117 = vadd.f32 %v116, %v111
    %118 = vst [vmem:[#allocation7] sm:$0x3] %v117
    // Predicated region
    $region26: #{tpu_custom_call.1} parent=1 // pred_check
      _
    $region27: #{tpu_custom_call.1} parent=1 // pred_check_branch
      %120 = sbr.rel (0) target = $region29
    $region28: #{tpu_custom_call.1} parent=1 // pred_region
      %s122 = ssub.s32 32, 32
      %123 = vsyncadd [#allocation4], %s122
      %s125 = sshll.u32 [#allocation7], 4
      %s126 = int_to_ptr.vmem [resolvable:$true] %s125
      %128 = dma.vmem_to_hbm [thread:$0]  %s126, 32, %s3, [#allocation4]
    $region29: #{tpu_custom_call.1} parent=1 // pred_fallthru
      _
    // Predicated region
    $region30: #{tpu_custom_call.1} parent=1 // pred_check
      _
    $region31: #{tpu_custom_call.1} parent=1 // pred_check_branch
      %130 = sbr.rel (0) target = $region33
    $region32: #{tpu_custom_call.1} parent=1 // pred_region
      %131 = dma.done [#allocation4], 32
    $region33: #{tpu_custom_call.1} parent=1 // pred_fallthru
      _
    %132 = vsyncpa [#allocation3], 1
    %133 = vsyncpa [#allocation6], 1
    %134 = vsyncpa [#allocation4], 1

</llo_original>
